<compile_context>
chip_gen: v5e
topology: v5e:2x2
jax: 0.10.0
libtpu: 0.0.40
codegen_flags: <defaults>
</compile_context>

<pallas_src>
import numpy as np
import jax
import jax.numpy as jnp
from jax.experimental import pallas as pl
from jax.experimental.pallas import tpu as pltpu

C1 = 20  # conv1 output channels
C2 = 50  # conv2 output channels
H1 = 80  # fc1 hidden
NC = 3   # classes

# ---- packed-parameter slab layout (f32, feature-major, rows padded to 8) ----
_PARAM_SHAPES = [
    (3 * C1, 5),    # 0: W1t  (60, 5)  fused conv1: row = tap_k*20 + c_out
    (3 * C1, 1),    # 1: b1   (60, 1)  conv1 bias tiled 3x
    (C2, 3 * C1),   # 2: W2t  (50, 60) conv2 im2col weight (c_out, k*20 + c_in)
    (C2, 1),        # 3: b2   (50, 1)
    (H1, C2),       # 4: fc1 W (80, 50)  (PyTorch (out,in) layout, used directly)
    (H1, 1),        # 5: fc1 b (80, 1)
    (NC, H1),       # 6: fc2 W (3, 80)
    (NC, 1),        # 7: fc2 b (3, 1)
]


def _round_up(x, m):
    return (x + m - 1) // m * m


def _cdiv(a, b):
    return -(-a // b)


def _compute_offsets(shapes):
    offs, r = [], 0
    for rows, _ in shapes:
        offs.append(r)
        r = _round_up(r + rows, 8)
    return offs, _round_up(r, 8)


_PARAM_OFFS, _SLAB_ROWS = _compute_offsets(_PARAM_SHAPES)
_SLAB_COLS = 128


def _slab_slice(slab_ref, idx):
    rows, cols = _PARAM_SHAPES[idx]
    off = _PARAM_OFFS[idx]          # all offsets are multiples of 8 (sublane aligned)
    return slab_ref[off:off + rows, 0:cols]


# ------------------------------- kernel --------------------------------------
def _net_kernel(x_ref, slab_ref, out_ref):
    x = x_ref[...]                        # (5, TB) f32, lane-dense

    w1 = _slab_slice(slab_ref, 0)         # (60, 5)
    b1 = _slab_slice(slab_ref, 1)         # (60, 1)
    w2 = _slab_slice(slab_ref, 2)         # (50, 60)
    b2 = _slab_slice(slab_ref, 3)         # (50, 1)
    fw1 = _slab_slice(slab_ref, 4)        # (80, 50)
    fb1 = _slab_slice(slab_ref, 5)        # (80, 1)
    fw2 = _slab_slice(slab_ref, 6)        # (3, 80)
    fb2 = _slab_slice(slab_ref, 7)        # (3, 1)

    # conv1 at (row 0, cols 0..2), all 3 taps fused into one matmul; the ReLU'd
    # result is exactly conv2's im2col column for output position (0,0).
    cols = jnp.maximum(
        jnp.dot(w1, x, preferred_element_type=jnp.float32) + b1, 0.0)    # (60, TB)
    # conv2 at (0,0) + ReLU == the post-pool feature vector.
    feat = jnp.maximum(
        jnp.dot(w2, cols, preferred_element_type=jnp.float32) + b2, 0.0)  # (50, TB)
    # fc1 + ReLU, fc2
    h1 = jnp.maximum(
        jnp.dot(fw1, feat, preferred_element_type=jnp.float32) + fb1, 0.0)  # (80, TB)
    z = jnp.dot(fw2, h1, preferred_element_type=jnp.float32) + fb2          # (3, TB)

    # log_softmax over classes (sublane axis, size 3; XLU/EUP slots have slack)
    m = jnp.max(z, axis=0, keepdims=True)
    lse = jnp.log(jnp.sum(jnp.exp(z - m), axis=0, keepdims=True)) + m
    out_ref[...] = z - lse                                                   # (3, TB)


# ------------------------------- wrapper --------------------------------------
_TB_MAX = 4096           # feature-major blocks at tb=4096 total ~5 MiB VMEM
_SINGLE_STEP_MAX = 2048  # below this, one grid step (best on 1-TC v5e/v6e)


def net_forward(x_nchw, slab, tb=None):
    """x_nchw: (N, 1, H, W) float32. Returns (N, 3) log-probabilities."""
    N, C, H, W = x_nchw.shape
    assert C == 1
    Wc = W - 4
    assert Wc >= 1                       # W >= 5 so both (1,3) convs are valid
    # avg_pool2d(kernel=1, stride=196) keeps only position (0,0) for these dims,
    # which is what makes the dead-code elimination below valid.
    assert H <= 196 and Wc <= 196

    if tb is None:
        if N <= _SINGLE_STEP_MAX:
            # single grid step: avoids paying the ~0.35us/step fixed cost twice
            # on single-TensorCore chips (v5e/v6e) for small batches.
            tb = _round_up(max(N, 1), 128)
        else:
            # even number of large steps: both v7x TensorCores get equal work
            # ("parallel" axis); the one extra step is noise on 1-TC chips.
            n_steps = 2 * _cdiv(N, 2 * _TB_MAX)
            tb = _round_up(_cdiv(N, n_steps), 128)
    Np = _round_up(N, tb)
    grid = (Np // tb,)

    # Only x[:, 0, 0, 0:5] can influence the output. Slice + transpose to
    # feature-major (5, Np) + zero-pad in one fused expression (wrapper is jitted).
    x_fm = jnp.pad(x_nchw[:, 0, 0, 0:5].T, ((0, 0), (0, Np - N)))

    out = pl.pallas_call(
        _net_kernel,
        out_shape=jax.ShapeDtypeStruct((NC, Np), jnp.float32),
        grid_spec=pltpu.PrefetchScalarGridSpec(
            num_scalar_prefetch=0,
            grid=grid,
            in_specs=[
                pl.BlockSpec((5, tb), lambda i: (0, i)),            # lane-dense input
                pl.BlockSpec((_SLAB_ROWS, _SLAB_COLS), lambda i: (0, 0)),  # resident weights
            ],
            out_specs=pl.BlockSpec((NC, tb), lambda i: (0, i)),     # lane-dense output
        ),
        compiler_params=pltpu.CompilerParams(
            dimension_semantics=("parallel",)),
    )(x_fm, slab)
    return out[:, :N].T                                             # (N, 3)


# --------------------------- parameter handling --------------------------------
def init_torch_params(key):
    """Deterministic PyTorch-default-like init; returns params in PyTorch layouts."""
    ks = jax.random.split(key, 8)

    def u(k, shape, fan_in):
        bound = 1.0 / np.sqrt(fan_in)
        return jax.random.uniform(k, shape, jnp.float32, -bound, bound)

    conv1_w = u(ks[0], (C1, 1, 1, 3), 1 * 1 * 3)     # OIHW
    conv1_b = u(ks[1], (C1,), 1 * 1 * 3)
    conv2_w = u(ks[2], (C2, C1, 1, 3), C1 * 1 * 3)   # OIHW
    conv2_b = u(ks[3], (C2,), C1 * 1 * 3)
    fc1_w = u(ks[4], (H1, C2), C2)                   # (out, in)
    fc1_b = u(ks[5], (H1,), C2)
    fc2_w = u(ks[6], (NC, H1), H1)
    fc2_b = u(ks[7], (NC,), H1)
    return conv1_w, conv1_b, conv2_w, conv2_b, fc1_w, fc1_b, fc2_w, fc2_b


def to_kernel_params(p):
    """Pack all weights/biases (feature-major) into one (8,128)-aligned f32 slab."""
    conv1_w, conv1_b, conv2_w, conv2_b, fc1_w, fc1_b, fc2_w, fc2_b = p

    # Fused conv1 weight, feature-major: W1t[k*C1 + co, s] = conv1_w[co,0,0,s-k]
    # (k = conv1 output spatial col / conv2 tap, s = input sample index 0..4).
    w1_ct = conv1_w[:, 0, 0, :]                                   # (20, 3): (c_out, tap)
    w1t = jnp.zeros((3 * C1, 5), jnp.float32)
    for k in range(3):
        w1t = w1t.at[k * C1:(k + 1) * C1, k:k + 3].set(w1_ct)
    b1 = jnp.tile(conv1_b, 3).reshape(3 * C1, 1)                  # (60, 1)

    # conv2 im2col weight, feature-major: W2t[c2, k*C1 + ci] = conv2_w[c2, ci, 0, k]
    w2t = jnp.transpose(conv2_w[:, :, 0, :], (0, 2, 1)).reshape(C2, 3 * C1)
    b2 = conv2_b.reshape(C2, 1)

    fw1 = fc1_w                                                   # (80, 50)
    fb1 = fc1_b.reshape(H1, 1)
    fw2 = fc2_w                                                   # (3, 80)
    fb2 = fc2_b.reshape(NC, 1)

    mats = [w1t, b1, w2t, b2, fw1, fb1, fw2, fb2]
    slab = jnp.zeros((_SLAB_ROWS, _SLAB_COLS), jnp.float32)
    for arr, (rows, cols), off in zip(mats, _PARAM_SHAPES, _PARAM_OFFS):
        assert arr.shape == (rows, cols)
        slab = slab.at[off:off + rows, 0:cols].set(arr)
    return slab


def reference_forward(x_nchw, p):
    """Independent pure-JAX reference using XLA convs (full maps, NCHW / OIHW)."""
    conv1_w, conv1_b, conv2_w, conv2_b, fc1_w, fc1_b, fc2_w, fc2_b = p
    dn = ("NCHW", "OIHW", "NCHW")
    y = jax.lax.conv_general_dilated(x_nchw, conv1_w, (1, 1), "VALID",
                                     dimension_numbers=dn,
                                     precision=jax.lax.Precision.HIGHEST)
    y = jax.nn.relu(y + conv1_b.reshape(1, C1, 1, 1))
    y = jax.lax.conv_general_dilated(y, conv2_w, (1, 1), "VALID",
                                     dimension_numbers=dn,
                                     precision=jax.lax.Precision.HIGHEST)
    y = jax.nn.relu(y + conv2_b.reshape(1, C2, 1, 1))
    y = y[:, :, ::196, ::196]                     # avg_pool2d(kernel=1, stride=196)
    feat = y.reshape(y.shape[0], C2)              # (N, 50)  (see TODO(synk) above)
    h = jax.nn.relu(jnp.dot(feat, fc1_w.T, precision="highest") + fc1_b)
    z = jnp.dot(h, fc2_w.T, precision="highest") + fc2_b
    return jax.nn.log_softmax(z, axis=1)


if __name__ == "__main__":
    key = jax.random.PRNGKey(0)
    k_x, k_p = jax.random.split(key)

    N, H, W = 2, 8, 16                       # small EEG-like window: 8 channels x 16 samples
    x = jax.random.normal(k_x, (N, 1, H, W), jnp.float32)

    torch_params = init_torch_params(k_p)
    slab = to_kernel_params(torch_params)

    fwd = jax.jit(net_forward)
    out = jax.block_until_ready(fwd(x, slab))

    ref = jax.block_until_ready(reference_forward(x, torch_params))
    np.testing.assert_allclose(np.asarray(out), np.asarray(ref), rtol=1e-2, atol=1e-2)

    assert out.shape == (N, NC)
    print("KERNEL_OK")
</pallas_src>

<mosaic_0001>
module attributes {stable_mosaic.version = 11 : i64} {
  func.func @_net_kernel(%arg0: i32, %arg1: memref<5x128xf32, #tpu.memory_space<vmem>>, %arg2: memref<416x128xf32, #tpu.memory_space<vmem>>, %arg3: memref<3x128xf32, #tpu.memory_space<vmem>>) attributes {dimension_semantics = [#tpu.dimension_semantics<parallel>], iteration_bounds = array<i64: 1>, scalar_prefetch = 0 : i64, scratch_operands = 0 : i64, tpu.core_type = #tpu.core_type<tc>, window_params = [{transform_indices = @transform_0, window_bounds = array<i64: 5, 128>}, {pipeline_mode = #tpu.pipeline_mode<synchronous>, transform_indices = @transform_1, window_bounds = array<i64: 416, 128>}, {transform_indices = @transform_2, window_bounds = array<i64: 3, 128>}]} {
    %c0 = arith.constant 0 : index
    %c0_0 = arith.constant 0 : index
    %0 = vector.load %arg1[%c0, %c0_0] : memref<5x128xf32, #tpu.memory_space<vmem>>, vector<5x128xf32>
    %c0_1 = arith.constant 0 : index
    %c0_2 = arith.constant 0 : index
    %1 = vector.load %arg2[%c0_1, %c0_2] : memref<416x128xf32, #tpu.memory_space<vmem>>, vector<60x5xf32>
    %c64 = arith.constant 64 : index
    %c0_3 = arith.constant 0 : index
    %2 = vector.load %arg2[%c64, %c0_3] : memref<416x128xf32, #tpu.memory_space<vmem>>, vector<60x1xf32>
    %c128 = arith.constant 128 : index
    %c0_4 = arith.constant 0 : index
    %3 = vector.load %arg2[%c128, %c0_4] : memref<416x128xf32, #tpu.memory_space<vmem>>, vector<50x60xf32>
    %c184 = arith.constant 184 : index
    %c0_5 = arith.constant 0 : index
    %4 = vector.load %arg2[%c184, %c0_5] : memref<416x128xf32, #tpu.memory_space<vmem>>, vector<50x1xf32>
    %c240 = arith.constant 240 : index
    %c0_6 = arith.constant 0 : index
    %5 = vector.load %arg2[%c240, %c0_6] : memref<416x128xf32, #tpu.memory_space<vmem>>, vector<80x50xf32>
    %c320 = arith.constant 320 : index
    %c0_7 = arith.constant 0 : index
    %6 = vector.load %arg2[%c320, %c0_7] : memref<416x128xf32, #tpu.memory_space<vmem>>, vector<80x1xf32>
    %c400 = arith.constant 400 : index
    %c0_8 = arith.constant 0 : index
    %7 = vector.load %arg2[%c400, %c0_8] : memref<416x128xf32, #tpu.memory_space<vmem>>, vector<3x80xf32>
    %c408 = arith.constant 408 : index
    %c0_9 = arith.constant 0 : index
    %8 = vector.load %arg2[%c408, %c0_9] : memref<416x128xf32, #tpu.memory_space<vmem>>, vector<3x1xf32>
    %cst = arith.constant dense<0.000000e+00> : vector<60x128xf32>
    %9 = tpu.matmul %1, %0, %cst {dimension_numbers = #tpu.dot_dimension_numbers<[1], [0], [0], [1], [0, 0, 1, 1], [], []>} : vector<60x5xf32>, vector<5x128xf32>, vector<60x128xf32> -> vector<60x128xf32>
    %10 = vector.broadcast %2 : vector<60x1xf32> to vector<60x128xf32>
    %11 = arith.addf %9, %10 : vector<60x128xf32>
    %cst_10 = arith.constant 0.000000e+00 : f32
    %12 = vector.broadcast %cst_10 : f32 to vector<60x128xf32>
    %13 = arith.maximumf %11, %12 : vector<60x128xf32>
    %cst_11 = arith.constant dense<0.000000e+00> : vector<50x128xf32>
    %14 = tpu.matmul %3, %13, %cst_11 {dimension_numbers = #tpu.dot_dimension_numbers<[1], [0], [0], [1], [0, 0, 1, 1], [], []>} : vector<50x60xf32>, vector<60x128xf32>, vector<50x128xf32> -> vector<50x128xf32>
    %15 = vector.broadcast %4 : vector<50x1xf32> to vector<50x128xf32>
    %16 = arith.addf %14, %15 : vector<50x128xf32>
    %cst_12 = arith.constant 0.000000e+00 : f32
    %17 = vector.broadcast %cst_12 : f32 to vector<50x128xf32>
    %18 = arith.maximumf %16, %17 : vector<50x128xf32>
    %cst_13 = arith.constant dense<0.000000e+00> : vector<80x128xf32>
    %19 = tpu.matmul %5, %18, %cst_13 {dimension_numbers = #tpu.dot_dimension_numbers<[1], [0], [0], [1], [0, 0, 1, 1], [], []>} : vector<80x50xf32>, vector<50x128xf32>, vector<80x128xf32> -> vector<80x128xf32>
    %20 = vector.broadcast %6 : vector<80x1xf32> to vector<80x128xf32>
    %21 = arith.addf %19, %20 : vector<80x128xf32>
    %cst_14 = arith.constant 0.000000e+00 : f32
    %22 = vector.broadcast %cst_14 : f32 to vector<80x128xf32>
    %23 = arith.maximumf %21, %22 : vector<80x128xf32>
    %cst_15 = arith.constant dense<0.000000e+00> : vector<3x128xf32>
    %24 = tpu.matmul %7, %23, %cst_15 {dimension_numbers = #tpu.dot_dimension_numbers<[1], [0], [0], [1], [0, 0, 1, 1], [], []>} : vector<3x80xf32>, vector<80x128xf32>, vector<3x128xf32> -> vector<3x128xf32>
    %25 = vector.broadcast %8 : vector<3x1xf32> to vector<3x128xf32>
    %26 = arith.addf %24, %25 : vector<3x128xf32>
    %cst_16 = arith.constant dense<0xFF800000> : vector<128xf32>
    %27 = vector.multi_reduction <maximumf>, %26, %cst_16 [0] : vector<3x128xf32> to vector<128xf32>
    %28 = vector.shape_cast %27 : vector<128xf32> to vector<1x128xf32>
    %29 = vector.broadcast %28 : vector<1x128xf32> to vector<3x128xf32>
    %30 = arith.subf %26, %29 : vector<3x128xf32>
    %31 = math.exp %30 : vector<3x128xf32>
    %cst_17 = arith.constant dense<0.000000e+00> : vector<128xf32>
    %32 = vector.multi_reduction <add>, %31, %cst_17 [0] : vector<3x128xf32> to vector<128xf32>
    %33 = vector.shape_cast %32 : vector<128xf32> to vector<1x128xf32>
    %34 = math.log %33 : vector<1x128xf32>
    %35 = arith.addf %34, %28 : vector<1x128xf32>
    %36 = vector.broadcast %35 : vector<1x128xf32> to vector<3x128xf32>
    %37 = arith.subf %26, %36 : vector<3x128xf32>
    %c0_18 = arith.constant 0 : index
    %c0_19 = arith.constant 0 : index
    %38 = vector.load %arg3[%c0_18, %c0_19] : memref<3x128xf32, #tpu.memory_space<vmem>>, vector<3x128xf32>
    tpu.vector_store %arg3[%c0_18, %c0_19], %37 {strides = array<i32>} : memref<3x128xf32, #tpu.memory_space<vmem>>, vector<3x128xf32>,
    return
  }
  func.func @transform_0(%arg0: i32) -> (i32, i32) {
    %c0_i32 = arith.constant 0 : i32
    %c0_i32_0 = arith.constant 0 : i32
    return %c0_i32, %arg0 : i32, i32
  }
  func.func @transform_1(%arg0: i32) -> (i32, i32) {
    %c0_i32 = arith.constant 0 : i32
    %c0_i32_0 = arith.constant 0 : i32
    %c0_i32_1 = arith.constant 0 : i32
    return %c0_i32, %c0_i32_0 : i32, i32
  }
  func.func @transform_2(%arg0: i32) -> (i32, i32) {
    %c0_i32 = arith.constant 0 : i32
    %c0_i32_0 = arith.constant 0 : i32
    return %c0_i32, %arg0 : i32, i32
  }
}

</mosaic_0001>

<llo_original>
// kernel: net_forward.1
$region0: #{net_forward.1}
  #allocation0 [shape = 'u32[]', space=smem, size = 0x4, offset = 0x4, fixed_abs, tag = 'smem constant byte address 0x4 - core index']
  #allocation1 [shape = 'u32[72,128]{1,0:T(1,128)}', space=vmem, size = 0x9000, scoped, tag = 'internal scratch']
  %s0 = inlined_call_operand.vmem [shape: f32[5,128], index: 0, kind: input, shape index: {}]
  %s1 = inlined_call_operand.hbm [shape: f32[416,128], index: 1, kind: input, shape index: {}]
  %s2 = inlined_call_operand.vmem [shape: f32[3,128], index: 2, kind: output, shape index: {}]
  %s3 = sld [smem:[#allocation0]]
  $region22: #{net_forward.1} parent=0
    _
  %s5 = ssub.s32 1, %s3
  %s6 = scalar_select 0, %s5, %s3
  $region1: #{net_forward.1} parent=0
    #allocation2 [shape = 'u8[212992]{0}', space=vmem, size = 0x34000, scoped, tag = 'input window, operand 1, single buffered']
    #allocation3 [shape = 's32[1]{0}', space=sflag, size = 0x4, scoped, tag = 'scoped memory for net_forward.1']
    %7 = vsyncpa [#allocation3], 0
    // Predicated region
    $region2: #{net_forward.1} parent=1 // pred_check
      _
    $region3: #{net_forward.1} parent=1 // pred_check_branch
      %9 = sbr.rel (0) target = $region5
    $region4: #{net_forward.1} parent=1 // pred_region
      _
    $region5: #{net_forward.1} parent=1 // pred_fallthru
      _
    // Predicated region
    $region6: #{net_forward.1} parent=1 // pred_check
      _
    $region7: #{net_forward.1} parent=1 // pred_check_branch
      %11 = sbr.rel (0) target = $region9
    $region8: #{net_forward.1} parent=1 // pred_region
      %13 = vsyncadd [#allocation3], 0
      %s14 = sshll.u32 %s1, 4
      %s15 = int_to_ptr.hbm [resolvable:$true] %s14
      %s16 = sshll.u32 [#allocation2], 4
      %s17 = int_to_ptr.vmem [resolvable:$true] %s16
      %22 = dma.hbm_to_vmem [thread:$0]  %s15, 6656, %s17, [#allocation3], 128, 128, 8
    $region9: #{net_forward.1} parent=1 // pred_fallthru
      _
    // Predicated region
    $region10: #{net_forward.1} parent=1 // pred_check
      _
    $region11: #{net_forward.1} parent=1 // pred_check_branch
      %24 = sbr.rel (0) target = $region13
    $region12: #{net_forward.1} parent=1 // pred_region
      %26 = dma.done [#allocation3], 6656
    $region13: #{net_forward.1} parent=1 // pred_fallthru
      _
    %v27 = vld [vmem:[%s0] sm:$0x1f]
    %v28 = vld [vmem:[#allocation2] sm:$0xff]
    %v29 = vld [vmem:[#allocation2 + $0x8] sm:$0xff]
    %v30 = vld [vmem:[#allocation2 + $0x10] sm:$0xff]
    %v31 = vld [vmem:[#allocation2 + $0x18] sm:$0xff]
    %v32 = vld [vmem:[#allocation2 + $0x20] sm:$0xff]
    %v33 = vld [vmem:[#allocation2 + $0x28] sm:$0xff]
    %v34 = vld [vmem:[#allocation2 + $0x30] sm:$0xff]
    %v35 = vld [vmem:[#allocation2 + $0x38] sm:$0xf]
    %v36 = vld [vmem:[#allocation2 + $0x40] sm:$0xff]
    %v37 = vld [vmem:[#allocation2 + $0x48] sm:$0xff]
    %v38 = vld [vmem:[#allocation2 + $0x50] sm:$0xff]
    %v39 = vld [vmem:[#allocation2 + $0x58] sm:$0xff]
    %v40 = vld [vmem:[#allocation2 + $0x60] sm:$0xff]
    %v41 = vld [vmem:[#allocation2 + $0x68] sm:$0xff]
    %v42 = vld [vmem:[#allocation2 + $0x70] sm:$0xff]
    %v43 = vld [vmem:[#allocation2 + $0x78] sm:$0xf]
    %v44 = vld [vmem:[#allocation2 + $0x80] sm:$0xff]
    %v45 = vld [vmem:[#allocation2 + $0x88] sm:$0xff]
    %v46 = vld [vmem:[#allocation2 + $0x90] sm:$0xff]
    %v47 = vld [vmem:[#allocation2 + $0x98] sm:$0xff]
    %v48 = vld [vmem:[#allocation2 + $0xa0] sm:$0xff]
    %v49 = vld [vmem:[#allocation2 + $0xa8] sm:$0xff]
    %v50 = vld [vmem:[#allocation2 + $0xb0] sm:$0x3]
    %v51 = vld [vmem:[#allocation2 + $0xb8] sm:$0xff]
    %v52 = vld [vmem:[#allocation2 + $0xc0] sm:$0xff]
    %v53 = vld [vmem:[#allocation2 + $0xc8] sm:$0xff]
    %v54 = vld [vmem:[#allocation2 + $0xd0] sm:$0xff]
    %v55 = vld [vmem:[#allocation2 + $0xd8] sm:$0xff]
    %v56 = vld [vmem:[#allocation2 + $0xe0] sm:$0xff]
    %v57 = vld [vmem:[#allocation2 + $0xe8] sm:$0x3]
    %v58 = vld [vmem:[#allocation2 + $0xf0] sm:$0xff]
    %v59 = vld [vmem:[#allocation2 + $0xf8] sm:$0xff]
    %v60 = vld [vmem:[#allocation2 + $0x100] sm:$0xff]
    %v61 = vld [vmem:[#allocation2 + $0x108] sm:$0xff]
    %v62 = vld [vmem:[#allocation2 + $0x110] sm:$0xff]
    %v63 = vld [vmem:[#allocation2 + $0x118] sm:$0xff]
    %v64 = vld [vmem:[#allocation2 + $0x120] sm:$0xff]
    %v65 = vld [vmem:[#allocation2 + $0x128] sm:$0xff]
    %v66 = vld [vmem:[#allocation2 + $0x130] sm:$0xff]
    %v67 = vld [vmem:[#allocation2 + $0x138] sm:$0xff]
    %v68 = vld [vmem:[#allocation2 + $0x140] sm:$0xff]
    %v69 = vld [vmem:[#allocation2 + $0x148] sm:$0xff]
    %v70 = vld [vmem:[#allocation2 + $0x150] sm:$0xff]
    %v71 = vld [vmem:[#allocation2 + $0x158] sm:$0xff]
    %v72 = vld [vmem:[#allocation2 + $0x160] sm:$0xff]
    %v73 = vld [vmem:[#allocation2 + $0x168] sm:$0xff]
    %v74 = vld [vmem:[#allocation2 + $0x170] sm:$0xff]
    %v75 = vld [vmem:[#allocation2 + $0x178] sm:$0xff]
    %v76 = vld [vmem:[#allocation2 + $0x180] sm:$0xff]
    %v77 = vld [vmem:[#allocation2 + $0x188] sm:$0xff]
    %v78 = vld [vmem:[#allocation2 + $0x190] sm:$0x7]
    %v79 = vld [vmem:[#allocation2 + $0x198] sm:$0x7]
    %81 = vset.pattern.permute.xlu0 0
    %82 = vperm.xlu0 %81, %v36
    %v83 = vpop.permute.xlu0 %82
    %86 = vset.pattern.permute.xlu0 0
    %87 = vperm.xlu0 %86, %v37
    %v88 = vpop.permute.xlu0 %87
    %91 = vset.pattern.permute.xlu0 0
    %92 = vperm.xlu0 %91, %v38
    %v93 = vpop.permute.xlu0 %92
    %96 = vset.pattern.permute.xlu0 0
    %97 = vperm.xlu0 %96, %v39
    %v98 = vpop.permute.xlu0 %97
    %101 = vset.pattern.permute.xlu0 0
    %102 = vperm.xlu0 %101, %v40
    %v103 = vpop.permute.xlu0 %102
    %106 = vset.pattern.permute.xlu0 0
    %107 = vperm.xlu0 %106, %v41
    %v108 = vpop.permute.xlu0 %107
    %111 = vset.pattern.permute.xlu0 0
    %112 = vperm.xlu0 %111, %v42
    %v113 = vpop.permute.xlu0 %112
    %116 = vset.pattern.permute.xlu0 0
    %117 = vperm.xlu0 %116, %v43
    %v118 = vpop.permute.xlu0 %117
    %vm120 = vcmask 39936
    %v122 = vsel %vm120, %v28, 0
    %v125 = vsel %vm120, %v29, 0
    %v128 = vsel %vm120, %v30, 0
    %v131 = vsel %vm120, %v31, 0
    %v134 = vsel %vm120, %v32, 0
    %v137 = vsel %vm120, %v33, 0
    %v140 = vsel %vm120, %v34, 0
    %v143 = vsel %vm120, %v35, 0
    %vm145 = vcmask 1044480
    %v147 = vsel %vm145, %v27, 0
    %149 = vmatpush.msra.mxu0 0.0
    %150 = vmatpush.msra.mxu0 0.0
    %151 = vmatpush.msra.mxu0 0.0
    %152 = vmatpush.msra.mxu0 0.0
    %153 = vmatpush.msra.mxu0 0.0
    %154 = vmatpush.msra.mxu0 0.0
    %155 = vmatpush.msra.mxu0 0.0
    %156 = vmatpush.msra.mxu0 0.0
    %157 = vmatpush.msra.mxu0 0.0
    %158 = vmatpush.msra.mxu0 0.0
    %159 = vmatpush.msra.mxu0 0.0
    %160 = vmatpush.msra.mxu0 0.0
    %161 = vmatpush.msra.mxu0 0.0
    %162 = vmatpush.msra.mxu0 0.0
    %163 = vmatpush.msra.mxu0 0.0
    %164 = vmatpush.msra.mxu0 %v147
    %165 = vmatmul.f32.gmra.mxu0 %v122
    %v166 = vpop.f32.mrf.mxu0
    %v167 = vadd.f32 %v83, %v166
    %168 = vmatmul.f32.gmra.mxu0 %v125
    %v169 = vpop.f32.mrf.mxu0
    %v170 = vadd.f32 %v88, %v169
    %171 = vmatmul.f32.gmra.mxu0 %v128
    %v172 = vpop.f32.mrf.mxu0
    %v173 = vadd.f32 %v93, %v172
    %174 = vmatmul.f32.gmra.mxu0 %v131
    %v175 = vpop.f32.mrf.mxu0
    %v176 = vadd.f32 %v98, %v175
    %177 = vmatmul.f32.gmra.mxu0 %v134
    %v178 = vpop.f32.mrf.mxu0
    %v179 = vadd.f32 %v103, %v178
    %180 = vmatmul.f32.gmra.mxu0 %v137
    %v181 = vpop.f32.mrf.mxu0
    %v182 = vadd.f32 %v108, %v181
    %183 = vmatmul.f32.gmra.mxu0 %v140
    %v184 = vpop.f32.mrf.mxu0
    %v185 = vadd.f32 %v113, %v184
    %186 = vmatmul.f32.gmra.mxu0 %v143
    %v187 = vpop.f32.mrf.mxu0
    %v188 = vadd.f32 %v118, %v187
    %189 = vdwg.mxu0
    %v190 = vmax.f32 %v167, 0.0
    %v191 = vmax.f32 %v170, 0.0
    %v192 = vmax.f32 %v173, 0.0
    %v193 = vmax.f32 %v176, 0.0
    %v194 = vmax.f32 %v179, 0.0
    %v195 = vmax.f32 %v182, 0.0
    %v196 = vmax.f32 %v185, 0.0
    %v197 = vmax.f32 %v188, 0.0
    %199 = vset.pattern.permute.xlu0 0
    %200 = vperm.xlu0 %199, %v51
    %v201 = vpop.permute.xlu0 %200
    %204 = vset.pattern.permute.xlu0 0
    %205 = vperm.xlu0 %204, %v52
    %v206 = vpop.permute.xlu0 %205
    %209 = vset.pattern.permute.xlu0 0
    %210 = vperm.xlu0 %209, %v53
    %v211 = vpop.permute.xlu0 %210
    %214 = vset.pattern.permute.xlu0 0
    %215 = vperm.xlu0 %214, %v54
    %v216 = vpop.permute.xlu0 %215
    %219 = vset.pattern.permute.xlu0 0
    %220 = vperm.xlu0 %219, %v55
    %v221 = vpop.permute.xlu0 %220
    %224 = vset.pattern.permute.xlu0 0
    %225 = vperm.xlu0 %224, %v56
    %v226 = vpop.permute.xlu0 %225
    %229 = vset.pattern.permute.xlu0 0
    %230 = vperm.xlu0 %229, %v57
    %v231 = vpop.permute.xlu0 %230
    %vm233 = vcmask 490496
    %v235 = vsel %vm233, %v44, 0
    %v238 = vsel %vm233, %v45, 0
    %v241 = vsel %vm233, %v46, 0
    %v244 = vsel %vm233, %v47, 0
    %v247 = vsel %vm233, %v48, 0
    %v250 = vsel %vm233, %v49, 0
    %v253 = vsel %vm233, %v50, 0
    %vm255 = vcmask 1043456
    %v257 = vsel %vm255, %v197, 0
    %259 = vmatpush.msra.mxu0 0.0
    %260 = vmatpush.msra.mxu0 0.0
    %261 = vmatpush.msra.mxu0 0.0
    %262 = vmatpush.msra.mxu0 0.0
    %263 = vmatpush.msra.mxu0 0.0
    %264 = vmatpush.msra.mxu0 0.0
    %265 = vmatpush.msra.mxu0 0.0
    %266 = vmatpush.msra.mxu0 0.0
    %267 = vmatpush.msra.mxu0 %v257
    %268 = vmatpush.msra.mxu0 %v196
    %269 = vmatpush.msra.mxu0 %v195
    %270 = vmatpush.msra.mxu0 %v194
    %271 = vmatpush.msra.mxu0 %v193
    %272 = vmatpush.msra.mxu0 %v192
    %273 = vmatpush.msra.mxu0 %v191
    %274 = vmatpush.msra.mxu0 %v190
    %275 = vmatmul.f32.gmra.mxu0 %v235
    %v276 = vpop.f32.mrf.mxu0
    %v277 = vadd.f32 %v201, %v276
    %278 = vmatmul.f32.gmra.mxu0 %v238
    %v279 = vpop.f32.mrf.mxu0
    %v280 = vadd.f32 %v206, %v279
    %281 = vmatmul.f32.gmra.mxu0 %v241
    %v282 = vpop.f32.mrf.mxu0
    %v283 = vadd.f32 %v211, %v282
    %284 = vmatmul.f32.gmra.mxu0 %v244
    %v285 = vpop.f32.mrf.mxu0
    %v286 = vadd.f32 %v216, %v285
    %287 = vmatmul.f32.gmra.mxu0 %v247
    %v288 = vpop.f32.mrf.mxu0
    %v289 = vadd.f32 %v221, %v288
    %290 = vmatmul.f32.gmra.mxu0 %v250
    %v291 = vpop.f32.mrf.mxu0
    %v292 = vadd.f32 %v226, %v291
    %293 = vmatmul.f32.gmra.mxu0 %v253
    %v294 = vpop.f32.mrf.mxu0
    %v295 = vadd.f32 %v231, %v294
    %296 = vdwg.mxu0
    %v297 = vmax.f32 %v277, 0.0
    %v298 = vmax.f32 %v280, 0.0
    %v299 = vmax.f32 %v283, 0.0
    %v300 = vmax.f32 %v286, 0.0
    %v301 = vmax.f32 %v289, 0.0
    %v302 = vmax.f32 %v292, 0.0
    %v303 = vmax.f32 %v295, 0.0
    %305 = vset.pattern.permute.xlu0 0
    %306 = vperm.xlu0 %305, %v68
    %v307 = vpop.permute.xlu0 %306
    %310 = vset.pattern.permute.xlu0 0
    %311 = vperm.xlu0 %310, %v69
    %v312 = vpop.permute.xlu0 %311
    %315 = vset.pattern.permute.xlu0 0
    %316 = vperm.xlu0 %315, %v70
    %v317 = vpop.permute.xlu0 %316
    %320 = vset.pattern.permute.xlu0 0
    %321 = vperm.xlu0 %320, %v71
    %v322 = vpop.permute.xlu0 %321
    %325 = vset.pattern.permute.xlu0 0
    %326 = vperm.xlu0 %325, %v72
    %v327 = vpop.permute.xlu0 %326
    %330 = vset.pattern.permute.xlu0 0
    %331 = vperm.xlu0 %330, %v73
    %v332 = vpop.permute.xlu0 %331
    %335 = vset.pattern.permute.xlu0 0
    %336 = vperm.xlu0 %335, %v74
    %v337 = vpop.permute.xlu0 %336
    %340 = vset.pattern.permute.xlu0 0
    %341 = vperm.xlu0 %340, %v75
    %v342 = vpop.permute.xlu0 %341
    %345 = vset.pattern.permute.xlu0 0
    %346 = vperm.xlu0 %345, %v76
    %v347 = vpop.permute.xlu0 %346
    %350 = vset.pattern.permute.xlu0 0
    %351 = vperm.xlu0 %350, %v77
    %v352 = vpop.permute.xlu0 %351
    %vm354 = vcmask 408576
    %v356 = vsel %vm354, %v58, 0
    %v359 = vsel %vm354, %v59, 0
    %v362 = vsel %vm354, %v60, 0
    %v365 = vsel %vm354, %v61, 0
    %v368 = vsel %vm354, %v62, 0
    %v371 = vsel %vm354, %v63, 0
    %v374 = vsel %vm354, %v64, 0
    %v377 = vsel %vm354, %v65, 0
    %v380 = vsel %vm354, %v66, 0
    %v383 = vsel %vm354, %v67, 0
    %vm385 = vcmask 1041408
    %v387 = vsel %vm385, %v303, 0
    %389 = vmatpush.msra.mxu0 0.0
    %390 = vmatpush.msra.mxu0 0.0
    %391 = vmatpush.msra.mxu0 0.0
    %392 = vmatpush.msra.mxu0 0.0
    %393 = vmatpush.msra.mxu0 0.0
    %394 = vmatpush.msra.mxu0 0.0
    %395 = vmatpush.msra.mxu0 0.0
    %396 = vmatpush.msra.mxu0 0.0
    %397 = vmatpush.msra.mxu0 0.0
    %398 = vmatpush.msra.mxu0 %v387
    %399 = vmatpush.msra.mxu0 %v302
    %400 = vmatpush.msra.mxu0 %v301
    %401 = vmatpush.msra.mxu0 %v300
    %402 = vmatpush.msra.mxu0 %v299
    %403 = vmatpush.msra.mxu0 %v298
    %404 = vmatpush.msra.mxu0 %v297
    %405 = vmatmul.f32.gmra.mxu0 %v356
    %v406 = vpop.f32.mrf.mxu0
    %v407 = vadd.f32 %v307, %v406
    %408 = vmatmul.f32.gmra.mxu0 %v359
    %v409 = vpop.f32.mrf.mxu0
    %v410 = vadd.f32 %v312, %v409
    %411 = vmatmul.f32.gmra.mxu0 %v362
    %v412 = vpop.f32.mrf.mxu0
    %v413 = vadd.f32 %v317, %v412
    %414 = vmatmul.f32.gmra.mxu0 %v365
    %v415 = vpop.f32.mrf.mxu0
    %v416 = vadd.f32 %v322, %v415
    %417 = vmatmul.f32.gmra.mxu0 %v368
    %v418 = vpop.f32.mrf.mxu0
    %v419 = vadd.f32 %v327, %v418
    %420 = vmatmul.f32.gmra.mxu0 %v371
    %v421 = vpop.f32.mrf.mxu0
    %v422 = vadd.f32 %v332, %v421
    %423 = vmatmul.f32.gmra.mxu0 %v374
    %v424 = vpop.f32.mrf.mxu0
    %v425 = vadd.f32 %v337, %v424
    %426 = vmatmul.f32.gmra.mxu0 %v377
    %v427 = vpop.f32.mrf.mxu0
    %v428 = vadd.f32 %v342, %v427
    %429 = vmatmul.f32.gmra.mxu0 %v380
    %v430 = vpop.f32.mrf.mxu0
    %v431 = vadd.f32 %v347, %v430
    %432 = vmatmul.f32.gmra.mxu0 %v383
    %v433 = vpop.f32.mrf.mxu0
    %v434 = vadd.f32 %v352, %v433
    %435 = vdwg.mxu0
    %v436 = vmax.f32 %v407, 0.0
    %v437 = vmax.f32 %v410, 0.0
    %v438 = vmax.f32 %v413, 0.0
    %v439 = vmax.f32 %v416, 0.0
    %v440 = vmax.f32 %v419, 0.0
    %v441 = vmax.f32 %v422, 0.0
    %v442 = vmax.f32 %v425, 0.0
    %v443 = vmax.f32 %v428, 0.0
    %v444 = vmax.f32 %v431, 0.0
    %v445 = vmax.f32 %v434, 0.0
    %447 = vset.pattern.permute.xlu0 0
    %448 = vperm.xlu0 %447, %v79
    %v449 = vpop.permute.xlu0 %448
    %vm451 = vcmask 654336
    %v453 = vsel %vm451, %v78, 0
    %455 = vmatpush.msra.mxu0 0.0
    %456 = vmatpush.msra.mxu0 0.0
    %457 = vmatpush.msra.mxu0 0.0
    %458 = vmatpush.msra.mxu0 0.0
    %459 = vmatpush.msra.mxu0 0.0
    %460 = vmatpush.msra.mxu0 0.0
    %461 = vmatpush.msra.mxu0 %v445
    %462 = vmatpush.msra.mxu0 %v444
    %463 = vmatpush.msra.mxu0 %v443
    %464 = vmatpush.msra.mxu0 %v442
    %465 = vmatpush.msra.mxu0 %v441
    %466 = vmatpush.msra.mxu0 %v440
    %467 = vmatpush.msra.mxu0 %v439
    %468 = vmatpush.msra.mxu0 %v438
    %469 = vmatpush.msra.mxu0 %v437
    %470 = vmatpush.msra.mxu0 %v436
    %471 = vmatmul.f32.gmra.mxu0 %v453
    %v472 = vpop.f32.mrf.mxu0
    %v473 = vadd.f32 %v449, %v472
    %474 = vdwg.mxu0
    %vm475 = vcmask 1042432
    %v476 = vsel %vm475, %v473, -inf
    %v477 = vrot.slane %v476, 4
    %v478 = vmax.f32 %v476, %v477
    %v479 = vrot.slane %v478, 2
    %v480 = vmax.f32 %v478, %v479
    %v481 = vrot.slane %v480, 1
    %v482 = vmax.f32 %v480, %v481
    %v483 = vsub.f32 %v473, %v482
    %v484 = vmul.f32 %v483, 1.442695
    %v485 = vpow.pop %v484
    %v486 = vsel %vm475, %v485, 0.0
    %v487 = vrot.slane %v486, 4
    %v488 = vadd.f32 %v486, %v487
    %v489 = vrot.slane %v488, 2
    %v490 = vadd.f32 %v488, %v489
    %v491 = vrot.slane %v490, 1
    %v492 = vadd.f32 %v490, %v491
    %v493 = vlog2.pop %v492
    %v494 = vmul.f32 %v493, 0.6931472
    %v495 = vadd.f32 %v494, %v482
    %v496 = vsub.f32 %v473, %v495
    %497 = vst [vmem:[%s2] sm:$0x7] %v496
    // Predicated region
    $region14: #{net_forward.1} parent=1 // pred_check
      _
    $region15: #{net_forward.1} parent=1 // pred_check_branch
      %499 = sbr.rel (0) target = $region17
    $region16: #{net_forward.1} parent=1 // pred_region
      _
    $region17: #{net_forward.1} parent=1 // pred_fallthru
      _
    // Predicated region
    $region18: #{net_forward.1} parent=1 // pred_check
      _
    $region19: #{net_forward.1} parent=1 // pred_check_branch
      %501 = sbr.rel (0) target = $region21
    $region20: #{net_forward.1} parent=1 // pred_region
      _
    $region21: #{net_forward.1} parent=1 // pred_fallthru
      _
    %502 = vsyncpa [#allocation3], 1

</llo_original>
